<compile_context>
chip_gen: v6e
topology: v6e:2x2x1
jax: 0.10.0
libtpu: 0.0.40
codegen_flags: <defaults>
</compile_context>

<pallas_src>
import jax
import jax.numpy as jnp
from jax.experimental import pallas as pl
from jax.experimental.pallas import tpu as pltpu

# ---------------- shapes ----------------
B, C, H_IMG, W_IMG = 1, 4, 16, 16          # per-branch input (batch must be 1)
D = C * H_IMG * W_IMG                      # 1024 flattened features
H_HID = 32                                 # hidden width of the shared net
F_OUT = 16                                 # per-branch feature dim (dim1 == dim2)

# Packed small-parameter buffer layout (f32, shape (H_HID + 2, H_HID) = (34, 32)):
#   rows [0:32), lanes [0:16)  -> w2 (32, 16)
#   row  32,     lanes [0:32)  -> b1 (32,)
#   row  33,     lanes [0:16)  -> b2 (16,)
ROW_B1 = H_HID
ROW_B2 = H_HID + 1
P_ROWS = H_HID + 2


def prepare_siamese_params(w1, b1, w2, b2):
    """One-time (outside-jit) conversion of the shared-net parameters into the
    two kernel operands: bf16 w1 and a packed f32 buffer holding {w2, b1, b2}."""
    w1b = jnp.asarray(w1, jnp.bfloat16)                                   # (D, H)
    packed = jnp.zeros((P_ROWS, H_HID), jnp.float32)
    packed = packed.at[:H_HID, :F_OUT].set(jnp.asarray(w2, jnp.float32))
    packed = packed.at[ROW_B1, :H_HID].set(
        jnp.asarray(b1, jnp.float32).reshape(H_HID))
    packed = packed.at[ROW_B2, :F_OUT].set(
        jnp.asarray(b2, jnp.float32).reshape(F_OUT))
    return w1b, packed


def siamese_kernel(x1_ref, x2_ref, w1_ref, p_ref, o_ref):
    """Both siamese branches fused into one matmul chain (gridless, no pipeline).

    x1_ref, x2_ref: (1, D)       f32   flattened NCHW inputs
    w1_ref        : (D, H)       bf16  shared first linear layer (MXU operand)
    p_ref         : (H+2, H)     f32   packed {w2, b1, b2}
    o_ref         : (2, F)       f32   row 0 = net(x1), row 1 = net(x2)
    """
    # Stack the two branch inputs along sublanes so the shared w1 is pushed
    # through the MXU exactly once for both branches.
    x = jnp.concatenate([x1_ref[...], x2_ref[...]], axis=0).astype(jnp.bfloat16)

    w1 = w1_ref[...]                                     # (D, H)  bf16
    p = p_ref[...]                                       # (H+2, H) f32
    w2 = p[:H_HID, :F_OUT].astype(jnp.bfloat16)          # (H, F)  bf16 (MXU)
    b1 = p[ROW_B1:ROW_B1 + 1, :]                         # (1, H)  f32
    b2 = p[ROW_B2:ROW_B2 + 1, :F_OUT]                    # (1, F)  f32

    # Layer 1: bf16 MXU, f32 accumulation; bias/ReLU in f32 (VPU).
    h = jnp.dot(x, w1, preferred_element_type=jnp.float32) + b1      # (2, H)
    h = jnp.maximum(h, 0.0)
    # Layer 2: bf16 MXU, f32 accumulation; bias in f32.
    o = jnp.dot(h.astype(jnp.bfloat16), w2,
                preferred_element_type=jnp.float32) + b2             # (2, F)
    o_ref[...] = o.astype(o_ref.dtype)


# Advisory cost hint: the call is tiny, let XLA schedule around it freely.
_COST = pl.CostEstimate(
    flops=2 * 2 * D * H_HID + 2 * 2 * H_HID * F_OUT,                  # ~133 KF
    transcendentals=0,
    bytes_accessed=(D * H_HID * 2          # w1 (bf16)
                    + 2 * D * 4            # x1 + x2 (f32)
                    + P_ROWS * H_HID * 4   # packed params (f32)
                    + 2 * F_OUT * 4),      # output (f32)
)


def my_siamese_2p(x1, x2, w1b, packed):
    """Pallas implementation of mySiamese2P.forward(x1, x2) -> (dim1+dim2,).

    `w1b` / `packed` must come from prepare_siamese_params() (done once,
    outside the jitted hot path), so no per-call dtype converts are emitted.
    """
    assert x1.shape == (B, C, H_IMG, W_IMG) and x2.shape == (B, C, H_IMG, W_IMG)
    assert w1b.dtype == jnp.bfloat16 and w1b.shape == (D, H_HID)
    assert packed.dtype == jnp.float32 and packed.shape == (P_ROWS, H_HID)

    # Metadata-only flattens (contiguous NCHW -> row vector); no concat op.
    x1f = x1.reshape(1, D).astype(jnp.float32)
    x2f = x2.reshape(1, D).astype(jnp.float32)

    vmem = pl.BlockSpec(memory_space=pltpu.MemorySpace.VMEM)
    feats = pl.pallas_call(
        siamese_kernel,
        out_shape=jax.ShapeDtypeStruct((2, F_OUT), jnp.float32),
        in_specs=[vmem, vmem, vmem, vmem],
        out_specs=vmem,
        cost_estimate=_COST,
    )(x1f, x2f, w1b, packed)

    # Row-major (2, F) -> (2F,) == [net(x1) | net(x2)]; metadata-only reshape.
    return feats.reshape(2 * F_OUT)


def _reference_f32(x1, x2, w1, b1, w2, b2):
    """Pure-f32 JAX reference (PyTorch semantics)."""
    def net(x):
        h = jnp.maximum(x.reshape(1, D).astype(jnp.float32) @ w1 + b1, 0.0)
        return h @ w2 + b2
    return jnp.concatenate([net(x1)[0], net(x2)[0]], axis=0)


def _reference_matching(x1, x2, w1, b1, w2, b2):
    """JAX reference matching the kernel's compute dtypes (bf16 MXU, f32 acc)."""
    w1b = w1.astype(jnp.bfloat16)
    w2b = w2.astype(jnp.bfloat16)
    def net(x):
        xb = x.reshape(1, D).astype(jnp.bfloat16)
        h = jnp.dot(xb, w1b, preferred_element_type=jnp.float32) + b1
        h = jnp.maximum(h, 0.0)
        return jnp.dot(h.astype(jnp.bfloat16), w2b,
                       preferred_element_type=jnp.float32) + b2
    return jnp.concatenate([net(x1)[0], net(x2)[0]], axis=0)


if __name__ == "__main__":
    key = jax.random.PRNGKey(0)
    k_x1, k_x2, k_w1, k_b1, k_w2, k_b2 = jax.random.split(key, 6)

    # Deterministic example inputs (NCHW, batch=1 per branch).
    x1 = jax.random.normal(k_x1, (B, C, H_IMG, W_IMG), dtype=jnp.float32)
    x2 = jax.random.normal(k_x2, (B, C, H_IMG, W_IMG), dtype=jnp.float32)

    # Deterministic shared-net parameters (weight sharing: same tensors for both branches).
    w1 = jax.random.normal(k_w1, (D, H_HID), dtype=jnp.float32) * 0.05
    b1 = jax.random.normal(k_b1, (H_HID,), dtype=jnp.float32) * 0.05
    w2 = jax.random.normal(k_w2, (H_HID, F_OUT), dtype=jnp.float32) * 0.05
    b2 = jax.random.normal(k_b2, (F_OUT,), dtype=jnp.float32) * 0.05

    # One-time parameter prep OUTSIDE the jitted hot path (bf16 w1 + packed buf).
    w1b, packed = jax.block_until_ready(prepare_siamese_params(w1, b1, w2, b2))

    fwd = jax.jit(my_siamese_2p)
    out = jax.block_until_ready(fwd(x1, x2, w1b, packed))

    assert out.shape == (2 * F_OUT,), out.shape

    # Exact-compute check (same dtypes as the kernel): tight tolerance.
    b1r, b2r = b1.reshape(1, H_HID), b2.reshape(1, F_OUT)
    ref_match = _reference_matching(x1, x2, w1, b1r, w2, b2r)
    assert jnp.allclose(out, ref_match, atol=1e-4, rtol=1e-4), \
        "mismatch vs matching-dtype reference"

    # Semantic check vs full-f32 PyTorch-equivalent forward: bf16-MXU tolerance.
    ref_f32 = _reference_f32(x1, x2, w1, b1r, w2, b2r)
    assert jnp.allclose(out, ref_f32, atol=5e-2, rtol=5e-2), \
        "mismatch vs f32 reference"

    print("KERNEL_OK")
</pallas_src>

<mosaic_0001>
module attributes {stable_mosaic.version = 11 : i64} {
  func.func @siamese_kernel(%arg0: memref<1x1024xf32, #tpu.memory_space<vmem>>, %arg1: memref<1x1024xf32, #tpu.memory_space<vmem>>, %arg2: memref<1024x32xbf16, #tpu.memory_space<vmem>>, %arg3: memref<34x32xf32, #tpu.memory_space<vmem>>, %arg4: memref<2x16xf32, #tpu.memory_space<vmem>>) attributes {dimension_semantics = [], scalar_prefetch = 0 : i64, scratch_operands = 0 : i64, tpu.core_type = #tpu.core_type<tc>} {
    %c0 = arith.constant 0 : index
    %c0_0 = arith.constant 0 : index
    %0 = vector.load %arg0[%c0, %c0_0] : memref<1x1024xf32, #tpu.memory_space<vmem>>, vector<1x1024xf32>
    %c0_1 = arith.constant 0 : index
    %c0_2 = arith.constant 0 : index
    %1 = vector.load %arg1[%c0_1, %c0_2] : memref<1x1024xf32, #tpu.memory_space<vmem>>, vector<1x1024xf32>
    %2 = tpu.concatenate %0, %1 in 0 : vector<1x1024xf32>, vector<1x1024xf32> -> vector<2x1024xf32>
    %3 = arith.truncf %2 : vector<2x1024xf32> to vector<2x1024xbf16>
    %c0_3 = arith.constant 0 : index
    %c0_4 = arith.constant 0 : index
    %4 = vector.load %arg2[%c0_3, %c0_4] : memref<1024x32xbf16, #tpu.memory_space<vmem>>, vector<1024x32xbf16>
    %c0_5 = arith.constant 0 : index
    %c0_6 = arith.constant 0 : index
    %5 = vector.load %arg3[%c0_5, %c0_6] : memref<34x32xf32, #tpu.memory_space<vmem>>, vector<34x32xf32>
    %6 = vector.extract_strided_slice %5 {offsets = [0, 0], sizes = [32, 16], strides = [1, 1]} : vector<34x32xf32> to vector<32x16xf32>
    %7 = arith.truncf %6 : vector<32x16xf32> to vector<32x16xbf16>
    %8 = vector.extract_strided_slice %5 {offsets = [32, 0], sizes = [1, 32], strides = [1, 1]} : vector<34x32xf32> to vector<1x32xf32>
    %9 = vector.extract_strided_slice %5 {offsets = [33, 0], sizes = [1, 16], strides = [1, 1]} : vector<34x32xf32> to vector<1x16xf32>
    %cst = arith.constant dense<0.000000e+00> : vector<2x32xf32>
    %10 = tpu.matmul %3, %4, %cst {dimension_numbers = #tpu.dot_dimension_numbers<[1], [0], [0], [1], [0, 0, 1, 1], [], []>} : vector<2x1024xbf16>, vector<1024x32xbf16>, vector<2x32xf32> -> vector<2x32xf32>
    %11 = vector.broadcast %8 : vector<1x32xf32> to vector<2x32xf32>
    %12 = arith.addf %10, %11 : vector<2x32xf32>
    %cst_7 = arith.constant 0.000000e+00 : f32
    %13 = vector.broadcast %cst_7 : f32 to vector<2x32xf32>
    %14 = arith.maximumf %12, %13 : vector<2x32xf32>
    %15 = arith.truncf %14 : vector<2x32xf32> to vector<2x32xbf16>
    %cst_8 = arith.constant dense<0.000000e+00> : vector<2x16xf32>
    %16 = tpu.matmul %15, %7, %cst_8 {dimension_numbers = #tpu.dot_dimension_numbers<[1], [0], [0], [1], [0, 0, 1, 1], [], []>} : vector<2x32xbf16>, vector<32x16xbf16>, vector<2x16xf32> -> vector<2x16xf32>
    %17 = vector.broadcast %9 : vector<1x16xf32> to vector<2x16xf32>
    %18 = arith.addf %16, %17 : vector<2x16xf32>
    %c0_9 = arith.constant 0 : index
    %c0_10 = arith.constant 0 : index
    %19 = vector.load %arg4[%c0_9, %c0_10] : memref<2x16xf32, #tpu.memory_space<vmem>>, vector<2x16xf32>
    tpu.vector_store %arg4[%c0_9, %c0_10], %18 {strides = array<i32>} : memref<2x16xf32, #tpu.memory_space<vmem>>, vector<2x16xf32>,
    return
  }
}

</mosaic_0001>

<llo_original>
// kernel: my_siamese_2p.1
$region0: #{my_siamese_2p.1}
  #allocation0 [shape = 'u32[]', space=smem, size = 0x4, offset = 0x4, fixed_abs, tag = 'smem constant byte address 0x4 - core index']
  #allocation1 [shape = 'u32[144,128]{1,0:T(1,128)}', space=vmem, size = 0x12000, scoped, tag = 'internal scratch']
  %s0 = inlined_call_operand.vmem [shape: f32[1,1024], index: 0, kind: input, shape index: {}]
  %s1 = inlined_call_operand.vmem [shape: f32[1,1024], index: 1, kind: input, shape index: {}]
  %s2 = inlined_call_operand.vmem [shape: bf16[1024,32], index: 2, kind: input, shape index: {}]
  %s3 = inlined_call_operand.vmem [shape: f32[34,32], index: 3, kind: input, shape index: {}]
  %s4 = inlined_call_operand.vmem [shape: f32[2,16], index: 4, kind: output, shape index: {}]
  %s5 = sld [smem:[#allocation0]]
  $region26: #{my_siamese_2p.1} parent=0
    _
  %s7 = ssub.s32 1, %s5
  %s8 = scalar_select 0, %s7, %s5
  // Predicated region
  $region2: #{my_siamese_2p.1} parent=0 // pred_check
    _
  $region3: #{my_siamese_2p.1} parent=0 // pred_check_branch
    %10 = sbr.rel (0) target = $region5
  $region4: #{my_siamese_2p.1} parent=0 // pred_region
    _
  $region5: #{my_siamese_2p.1} parent=0 // pred_fallthru
    _
  // Predicated region
  $region6: #{my_siamese_2p.1} parent=0 // pred_check
    _
  $region7: #{my_siamese_2p.1} parent=0 // pred_check_branch
    %12 = sbr.rel (0) target = $region9
  $region8: #{my_siamese_2p.1} parent=0 // pred_region
    _
  $region9: #{my_siamese_2p.1} parent=0 // pred_fallthru
    _
  // Predicated region
  $region10: #{my_siamese_2p.1} parent=0 // pred_check
    _
  $region11: #{my_siamese_2p.1} parent=0 // pred_check_branch
    %14 = sbr.rel (0) target = $region13
  $region12: #{my_siamese_2p.1} parent=0 // pred_region
    _
  $region13: #{my_siamese_2p.1} parent=0 // pred_fallthru
    _
  // Predicated region
  $region14: #{my_siamese_2p.1} parent=0 // pred_check
    _
  $region15: #{my_siamese_2p.1} parent=0 // pred_check_branch
    %16 = sbr.rel (0) target = $region17
  $region16: #{my_siamese_2p.1} parent=0 // pred_region
    _
  $region17: #{my_siamese_2p.1} parent=0 // pred_fallthru
    _
  %v18 = vld [vmem:[%s0] sm:$0xff]
  %v19 = vld [vmem:[%s1] sm:$0xff]
  %v21 = vlaneseq
  %v22 = vshrl.u32 %v21, 7
  %v23 = vsub.s32 0, %v22
  %v24 = vrot.slane %v18, %v23
  %v25 = vlaneseq
  %v26 = vshrl.u32 %v25, 7
  %v27 = vsub.s32 1, %v26
  %v28 = vrot.slane %v18, %v27
  %v29 = vlaneseq
  %v30 = vshrl.u32 %v29, 7
  %v31 = vsub.s32 2, %v30
  %v32 = vrot.slane %v18, %v31
  %v33 = vlaneseq
  %v34 = vshrl.u32 %v33, 7
  %v35 = vsub.s32 3, %v34
  %v36 = vrot.slane %v18, %v35
  %v37 = vlaneseq
  %v38 = vshrl.u32 %v37, 7
  %v39 = vsub.s32 4, %v38
  %v40 = vrot.slane %v18, %v39
  %v41 = vlaneseq
  %v42 = vshrl.u32 %v41, 7
  %v43 = vsub.s32 5, %v42
  %v44 = vrot.slane %v18, %v43
  %v45 = vlaneseq
  %v46 = vshrl.u32 %v45, 7
  %v47 = vsub.s32 6, %v46
  %v48 = vrot.slane %v18, %v47
  %v49 = vlaneseq
  %v50 = vshrl.u32 %v49, 7
  %v51 = vsub.s32 7, %v50
  %v52 = vrot.slane %v18, %v51
  %v62 = vlaneseq
  %v63 = vshrl.u32 %v62, 7
  %v64 = vsub.s32 0, %v63
  %v65 = vrot.slane %v19, %v64
  %v66 = vlaneseq
  %v67 = vshrl.u32 %v66, 7
  %v68 = vsub.s32 1, %v67
  %v69 = vrot.slane %v19, %v68
  %v70 = vlaneseq
  %v71 = vshrl.u32 %v70, 7
  %v72 = vsub.s32 2, %v71
  %v73 = vrot.slane %v19, %v72
  %v74 = vlaneseq
  %v75 = vshrl.u32 %v74, 7
  %v76 = vsub.s32 3, %v75
  %v77 = vrot.slane %v19, %v76
  %v78 = vlaneseq
  %v79 = vshrl.u32 %v78, 7
  %v80 = vsub.s32 4, %v79
  %v81 = vrot.slane %v19, %v80
  %v82 = vlaneseq
  %v83 = vshrl.u32 %v82, 7
  %v84 = vsub.s32 5, %v83
  %v85 = vrot.slane %v19, %v84
  %v86 = vlaneseq
  %v87 = vshrl.u32 %v86, 7
  %v88 = vsub.s32 6, %v87
  %v89 = vrot.slane %v19, %v88
  %v90 = vlaneseq
  %v91 = vshrl.u32 %v90, 7
  %v92 = vsub.s32 7, %v91
  %v93 = vrot.slane %v19, %v92
  %vm102 = vcmask 1040384
  %v103 = vsel %vm102, %v24, %v65
  %v104 = vsel %vm102, %v28, %v69
  %v105 = vsel %vm102, %v32, %v73
  %v106 = vsel %vm102, %v36, %v77
  %v107 = vsel %vm102, %v40, %v81
  %v108 = vsel %vm102, %v44, %v85
  %v109 = vsel %vm102, %v48, %v89
  %v110 = vsel %vm102, %v52, %v93
  %v111 = vpack.c.bf16 %v103, %v103
  %v112 = vpack.c.bf16 %v104, %v104
  %v113 = vpack.c.bf16 %v105, %v105
  %v114 = vpack.c.bf16 %v106, %v106
  %v115 = vpack.c.bf16 %v107, %v107
  %v116 = vpack.c.bf16 %v108, %v108
  %v117 = vpack.c.bf16 %v109, %v109
  %v118 = vpack.c.bf16 %v110, %v110
  %v119 = vld [vmem:[%s2] sm:$0xf]
  %v120 = vld [vmem:[%s2 + $0x4] sm:$0xf]
  %v121 = vld [vmem:[%s2 + $0x8] sm:$0xf]
  %v122 = vld [vmem:[%s2 + $0xc] sm:$0xf]
  %v123 = vld [vmem:[%s2 + $0x10] sm:$0xf]
  %v124 = vld [vmem:[%s2 + $0x14] sm:$0xf]
  %v125 = vld [vmem:[%s2 + $0x18] sm:$0xf]
  %v126 = vld [vmem:[%s2 + $0x1c] sm:$0xf]
  %v127 = vld [vmem:[%s2 + $0x20] sm:$0xf]
  %v128 = vld [vmem:[%s2 + $0x24] sm:$0xf]
  %v129 = vld [vmem:[%s2 + $0x28] sm:$0xf]
  %v130 = vld [vmem:[%s2 + $0x2c] sm:$0xf]
  %v131 = vld [vmem:[%s2 + $0x30] sm:$0xf]
  %v132 = vld [vmem:[%s2 + $0x34] sm:$0xf]
  %v133 = vld [vmem:[%s2 + $0x38] sm:$0xf]
  %v134 = vld [vmem:[%s2 + $0x3c] sm:$0xf]
  %v135 = vld [vmem:[%s2 + $0x40] sm:$0xf]
  %v136 = vld [vmem:[%s2 + $0x44] sm:$0xf]
  %v137 = vld [vmem:[%s2 + $0x48] sm:$0xf]
  %v138 = vld [vmem:[%s2 + $0x4c] sm:$0xf]
  %v139 = vld [vmem:[%s2 + $0x50] sm:$0xf]
  %v140 = vld [vmem:[%s2 + $0x54] sm:$0xf]
  %v141 = vld [vmem:[%s2 + $0x58] sm:$0xf]
  %v142 = vld [vmem:[%s2 + $0x5c] sm:$0xf]
  %v143 = vld [vmem:[%s2 + $0x60] sm:$0xf]
  %v144 = vld [vmem:[%s2 + $0x64] sm:$0xf]
  %v145 = vld [vmem:[%s2 + $0x68] sm:$0xf]
  %v146 = vld [vmem:[%s2 + $0x6c] sm:$0xf]
  %v147 = vld [vmem:[%s2 + $0x70] sm:$0xf]
  %v148 = vld [vmem:[%s2 + $0x74] sm:$0xf]
  %v149 = vld [vmem:[%s2 + $0x78] sm:$0xf]
  %v150 = vld [vmem:[%s2 + $0x7c] sm:$0xf]
  %v151 = vld [vmem:[%s2 + $0x80] sm:$0xf]
  %v152 = vld [vmem:[%s2 + $0x84] sm:$0xf]
  %v153 = vld [vmem:[%s2 + $0x88] sm:$0xf]
  %v154 = vld [vmem:[%s2 + $0x8c] sm:$0xf]
  %v155 = vld [vmem:[%s2 + $0x90] sm:$0xf]
  %v156 = vld [vmem:[%s2 + $0x94] sm:$0xf]
  %v157 = vld [vmem:[%s2 + $0x98] sm:$0xf]
  %v158 = vld [vmem:[%s2 + $0x9c] sm:$0xf]
  %v159 = vld [vmem:[%s2 + $0xa0] sm:$0xf]
  %v160 = vld [vmem:[%s2 + $0xa4] sm:$0xf]
  %v161 = vld [vmem:[%s2 + $0xa8] sm:$0xf]
  %v162 = vld [vmem:[%s2 + $0xac] sm:$0xf]
  %v163 = vld [vmem:[%s2 + $0xb0] sm:$0xf]
  %v164 = vld [vmem:[%s2 + $0xb4] sm:$0xf]
  %v165 = vld [vmem:[%s2 + $0xb8] sm:$0xf]
  %v166 = vld [vmem:[%s2 + $0xbc] sm:$0xf]
  %v167 = vld [vmem:[%s2 + $0xc0] sm:$0xf]
  %v168 = vld [vmem:[%s2 + $0xc4] sm:$0xf]
  %v169 = vld [vmem:[%s2 + $0xc8] sm:$0xf]
  %v170 = vld [vmem:[%s2 + $0xcc] sm:$0xf]
  %v171 = vld [vmem:[%s2 + $0xd0] sm:$0xf]
  %v172 = vld [vmem:[%s2 + $0xd4] sm:$0xf]
  %v173 = vld [vmem:[%s2 + $0xd8] sm:$0xf]
  %v174 = vld [vmem:[%s2 + $0xdc] sm:$0xf]
  %v175 = vld [vmem:[%s2 + $0xe0] sm:$0xf]
  %v176 = vld [vmem:[%s2 + $0xe4] sm:$0xf]
  %v177 = vld [vmem:[%s2 + $0xe8] sm:$0xf]
  %v178 = vld [vmem:[%s2 + $0xec] sm:$0xf]
  %v179 = vld [vmem:[%s2 + $0xf0] sm:$0xf]
  %v180 = vld [vmem:[%s2 + $0xf4] sm:$0xf]
  %v181 = vld [vmem:[%s2 + $0xf8] sm:$0xf]
  %v182 = vld [vmem:[%s2 + $0xfc] sm:$0xf]
  %v183 = vld [vmem:[%s2 + $0x100] sm:$0xf]
  %v184 = vld [vmem:[%s2 + $0x104] sm:$0xf]
  %v185 = vld [vmem:[%s2 + $0x108] sm:$0xf]
  %v186 = vld [vmem:[%s2 + $0x10c] sm:$0xf]
  %v187 = vld [vmem:[%s2 + $0x110] sm:$0xf]
  %v188 = vld [vmem:[%s2 + $0x114] sm:$0xf]
  %v189 = vld [vmem:[%s2 + $0x118] sm:$0xf]
  %v190 = vld [vmem:[%s2 + $0x11c] sm:$0xf]
  %v191 = vld [vmem:[%s2 + $0x120] sm:$0xf]
  %v192 = vld [vmem:[%s2 + $0x124] sm:$0xf]
  %v193 = vld [vmem:[%s2 + $0x128] sm:$0xf]
  %v194 = vld [vmem:[%s2 + $0x12c] sm:$0xf]
  %v195 = vld [vmem:[%s2 + $0x130] sm:$0xf]
  %v196 = vld [vmem:[%s2 + $0x134] sm:$0xf]
  %v197 = vld [vmem:[%s2 + $0x138] sm:$0xf]
  %v198 = vld [vmem:[%s2 + $0x13c] sm:$0xf]
  %v199 = vld [vmem:[%s2 + $0x140] sm:$0xf]
  %v200 = vld [vmem:[%s2 + $0x144] sm:$0xf]
  %v201 = vld [vmem:[%s2 + $0x148] sm:$0xf]
  %v202 = vld [vmem:[%s2 + $0x14c] sm:$0xf]
  %v203 = vld [vmem:[%s2 + $0x150] sm:$0xf]
  %v204 = vld [vmem:[%s2 + $0x154] sm:$0xf]
  %v205 = vld [vmem:[%s2 + $0x158] sm:$0xf]
  %v206 = vld [vmem:[%s2 + $0x15c] sm:$0xf]
  %v207 = vld [vmem:[%s2 + $0x160] sm:$0xf]
  %v208 = vld [vmem:[%s2 + $0x164] sm:$0xf]
  %v209 = vld [vmem:[%s2 + $0x168] sm:$0xf]
  %v210 = vld [vmem:[%s2 + $0x16c] sm:$0xf]
  %v211 = vld [vmem:[%s2 + $0x170] sm:$0xf]
  %v212 = vld [vmem:[%s2 + $0x174] sm:$0xf]
  %v213 = vld [vmem:[%s2 + $0x178] sm:$0xf]
  %v214 = vld [vmem:[%s2 + $0x17c] sm:$0xf]
  %v215 = vld [vmem:[%s2 + $0x180] sm:$0xf]
  %v216 = vld [vmem:[%s2 + $0x184] sm:$0xf]
  %v217 = vld [vmem:[%s2 + $0x188] sm:$0xf]
  %v218 = vld [vmem:[%s2 + $0x18c] sm:$0xf]
  %v219 = vld [vmem:[%s2 + $0x190] sm:$0xf]
  %v220 = vld [vmem:[%s2 + $0x194] sm:$0xf]
  %v221 = vld [vmem:[%s2 + $0x198] sm:$0xf]
  %v222 = vld [vmem:[%s2 + $0x19c] sm:$0xf]
  %v223 = vld [vmem:[%s2 + $0x1a0] sm:$0xf]
  %v224 = vld [vmem:[%s2 + $0x1a4] sm:$0xf]
  %v225 = vld [vmem:[%s2 + $0x1a8] sm:$0xf]
  %v226 = vld [vmem:[%s2 + $0x1ac] sm:$0xf]
  %v227 = vld [vmem:[%s2 + $0x1b0] sm:$0xf]
  %v228 = vld [vmem:[%s2 + $0x1b4] sm:$0xf]
  %v229 = vld [vmem:[%s2 + $0x1b8] sm:$0xf]
  %v230 = vld [vmem:[%s2 + $0x1bc] sm:$0xf]
  %v231 = vld [vmem:[%s2 + $0x1c0] sm:$0xf]
  %v232 = vld [vmem:[%s2 + $0x1c4] sm:$0xf]
  %v233 = vld [vmem:[%s2 + $0x1c8] sm:$0xf]
  %v234 = vld [vmem:[%s2 + $0x1cc] sm:$0xf]
  %v235 = vld [vmem:[%s2 + $0x1d0] sm:$0xf]
  %v236 = vld [vmem:[%s2 + $0x1d4] sm:$0xf]
  %v237 = vld [vmem:[%s2 + $0x1d8] sm:$0xf]
  %v238 = vld [vmem:[%s2 + $0x1dc] sm:$0xf]
  %v239 = vld [vmem:[%s2 + $0x1e0] sm:$0xf]
  %v240 = vld [vmem:[%s2 + $0x1e4] sm:$0xf]
  %v241 = vld [vmem:[%s2 + $0x1e8] sm:$0xf]
  %v242 = vld [vmem:[%s2 + $0x1ec] sm:$0xf]
  %v243 = vld [vmem:[%s2 + $0x1f0] sm:$0xf]
  %v244 = vld [vmem:[%s2 + $0x1f4] sm:$0xf]
  %v245 = vld [vmem:[%s2 + $0x1f8] sm:$0xf]
  %v246 = vld [vmem:[%s2 + $0x1fc] sm:$0xf]
  %v247 = vld [vmem:[%s3] sm:$0xff]
  %v248 = vld [vmem:[%s3 + $0x8] sm:$0xff]
  %v249 = vld [vmem:[%s3 + $0x10] sm:$0xff]
  %v250 = vld [vmem:[%s3 + $0x18] sm:$0xff]
  %v251 = vld [vmem:[%s3 + $0x20] sm:$0x3]
  %v252 = vpack.c.bf16 %v248, %v247
  %v253 = vpack.c.bf16 %v250, %v249
  %v254 = vlaneseq
  %v255 = vshrl.u32 %v254, 7
  %v256 = vsub.s32 0, %v255
  %v257 = vrot.slane %v251, %v256
  %v386 = vunpack.c.l.b16 %v119
  %v387 = vunpack.c.l.b16 %v120
  %v388 = vunpack.c.l.b16 %v121
  %v389 = vunpack.c.l.b16 %v122
  %v390 = vunpack.c.l.b16 %v123
  %v391 = vunpack.c.l.b16 %v124
  %v392 = vunpack.c.l.b16 %v125
  %v393 = vunpack.c.l.b16 %v126
  %v394 = vunpack.c.l.b16 %v127
  %v395 = vunpack.c.l.b16 %v128
  %v396 = vunpack.c.l.b16 %v129
  %v397 = vunpack.c.l.b16 %v130
  %v398 = vunpack.c.l.b16 %v131
  %v399 = vunpack.c.l.b16 %v132
  %v400 = vunpack.c.l.b16 %v133
  %v401 = vunpack.c.l.b16 %v134
  %v402 = vunpack.c.l.b16 %v135
  %v403 = vunpack.c.l.b16 %v136
  %v404 = vunpack.c.l.b16 %v137
  %v405 = vunpack.c.l.b16 %v138
  %v406 = vunpack.c.l.b16 %v139
  %v407 = vunpack.c.l.b16 %v140
  %v408 = vunpack.c.l.b16 %v141
  %v409 = vunpack.c.l.b16 %v142
  %v410 = vunpack.c.l.b16 %v143
  %v411 = vunpack.c.l.b16 %v144
  %v412 = vunpack.c.l.b16 %v145
  %v413 = vunpack.c.l.b16 %v146
  %v414 = vunpack.c.l.b16 %v147
  %v415 = vunpack.c.l.b16 %v148
  %v416 = vunpack.c.l.b16 %v149
  %v417 = vunpack.c.l.b16 %v150
  %v418 = vunpack.c.l.b16 %v151
  %v419 = vunpack.c.l.b16 %v152
  %v420 = vunpack.c.l.b16 %v153
  %v421 = vunpack.c.l.b16 %v154
  %v422 = vunpack.c.l.b16 %v155
  %v423 = vunpack.c.l.b16 %v156
  %v424 = vunpack.c.l.b16 %v157
  %v425 = vunpack.c.l.b16 %v158
  %v426 = vunpack.c.l.b16 %v159
  %v427 = vunpack.c.l.b16 %v160
  %v428 = vunpack.c.l.b16 %v161
  %v429 = vunpack.c.l.b16 %v162
  %v430 = vunpack.c.l.b16 %v163
  %v431 = vunpack.c.l.b16 %v164
  %v432 = vunpack.c.l.b16 %v165
  %v433 = vunpack.c.l.b16 %v166
  %v434 = vunpack.c.l.b16 %v167
  %v435 = vunpack.c.l.b16 %v168
  %v436 = vunpack.c.l.b16 %v169
  %v437 = vunpack.c.l.b16 %v170
  %v438 = vunpack.c.l.b16 %v171
  %v439 = vunpack.c.l.b16 %v172
  %v440 = vunpack.c.l.b16 %v173
  %v441 = vunpack.c.l.b16 %v174
  %v442 = vunpack.c.l.b16 %v175
  %v443 = vunpack.c.l.b16 %v176
  %v444 = vunpack.c.l.b16 %v177
  %v445 = vunpack.c.l.b16 %v178
  %v446 = vunpack.c.l.b16 %v179
  %v447 = vunpack.c.l.b16 %v180
  %v448 = vunpack.c.l.b16 %v181
  %v449 = vunpack.c.l.b16 %v182
  %v450 = vunpack.c.l.b16 %v183
  %v451 = vunpack.c.l.b16 %v184
  %v452 = vunpack.c.l.b16 %v185
  %v453 = vunpack.c.l.b16 %v186
  %v454 = vunpack.c.l.b16 %v187
  %v455 = vunpack.c.l.b16 %v188
  %v456 = vunpack.c.l.b16 %v189
  %v457 = vunpack.c.l.b16 %v190
  %v458 = vunpack.c.l.b16 %v191
  %v459 = vunpack.c.l.b16 %v192
  %v460 = vunpack.c.l.b16 %v193
  %v461 = vunpack.c.l.b16 %v194
  %v462 = vunpack.c.l.b16 %v195
  %v463 = vunpack.c.l.b16 %v196
  %v464 = vunpack.c.l.b16 %v197
  %v465 = vunpack.c.l.b16 %v198
  %v466 = vunpack.c.l.b16 %v199
  %v467 = vunpack.c.l.b16 %v200
  %v468 = vunpack.c.l.b16 %v201
  %v469 = vunpack.c.l.b16 %v202
  %v470 = vunpack.c.l.b16 %v203
  %v471 = vunpack.c.l.b16 %v204
  %v472 = vunpack.c.l.b16 %v205
  %v473 = vunpack.c.l.b16 %v206
  %v474 = vunpack.c.l.b16 %v207
  %v475 = vunpack.c.l.b16 %v208
  %v476 = vunpack.c.l.b16 %v209
  %v477 = vunpack.c.l.b16 %v210
  %v478 = vunpack.c.l.b16 %v211
  %v479 = vunpack.c.l.b16 %v212
  %v480 = vunpack.c.l.b16 %v213
  %v481 = vunpack.c.l.b16 %v214
  %v482 = vunpack.c.l.b16 %v215
  %v483 = vunpack.c.l.b16 %v216
  %v484 = vunpack.c.l.b16 %v217
  %v485 = vunpack.c.l.b16 %v218
  %v486 = vunpack.c.l.b16 %v219
  %v487 = vunpack.c.l.b16 %v220
  %v488 = vunpack.c.l.b16 %v221
  %v489 = vunpack.c.l.b16 %v222
  %v490 = vunpack.c.l.b16 %v223
  %v491 = vunpack.c.l.b16 %v224
  %v492 = vunpack.c.l.b16 %v225
  %v493 = vunpack.c.l.b16 %v226
  %v494 = vunpack.c.l.b16 %v227
  %v495 = vunpack.c.l.b16 %v228
  %v496 = vunpack.c.l.b16 %v229
  %v497 = vunpack.c.l.b16 %v230
  %v498 = vunpack.c.l.b16 %v231
  %v499 = vunpack.c.l.b16 %v232
  %v500 = vunpack.c.l.b16 %v233
  %v501 = vunpack.c.l.b16 %v234
  %v502 = vunpack.c.l.b16 %v235
  %v503 = vunpack.c.l.b16 %v236
  %v504 = vunpack.c.l.b16 %v237
  %v505 = vunpack.c.l.b16 %v238
  %v506 = vunpack.c.l.b16 %v239
  %v507 = vunpack.c.l.b16 %v240
  %v508 = vunpack.c.l.b16 %v241
  %v509 = vunpack.c.l.b16 %v242
  %v510 = vunpack.c.l.b16 %v243
  %v511 = vunpack.c.l.b16 %v244
  %v512 = vunpack.c.l.b16 %v245
  %v513 = vunpack.c.l.b16 %v246
  %v514 = vpack.c.b16 %v387, %v386
  %v515 = vpack.c.b16 %v389, %v388
  %v516 = vpack.c.b16 %v391, %v390
  %v517 = vpack.c.b16 %v393, %v392
  %v518 = vpack.c.b16 %v395, %v394
  %v519 = vpack.c.b16 %v397, %v396
  %v520 = vpack.c.b16 %v399, %v398
  %v521 = vpack.c.b16 %v401, %v400
  %v522 = vpack.c.b16 %v403, %v402
  %v523 = vpack.c.b16 %v405, %v404
  %v524 = vpack.c.b16 %v407, %v406
  %v525 = vpack.c.b16 %v409, %v408
  %v526 = vpack.c.b16 %v411, %v410
  %v527 = vpack.c.b16 %v413, %v412
  %v528 = vpack.c.b16 %v415, %v414
  %v529 = vpack.c.b16 %v417, %v416
  %v530 = vpack.c.b16 %v419, %v418
  %v531 = vpack.c.b16 %v421, %v420
  %v532 = vpack.c.b16 %v423, %v422
  %v533 = vpack.c.b16 %v425, %v424
  %v534 = vpack.c.b16 %v427, %v426
  %v535 = vpack.c.b16 %v429, %v428
  %v536 = vpack.c.b16 %v431, %v430
  %v537 = vpack.c.b16 %v433, %v432
  %v538 = vpack.c.b16 %v435, %v434
  %v539 = vpack.c.b16 %v437, %v436
  %v540 = vpack.c.b16 %v439, %v438
  %v541 = vpack.c.b16 %v441, %v440
  %v542 = vpack.c.b16 %v443, %v442
  %v543 = vpack.c.b16 %v445, %v444
  %v544 = vpack.c.b16 %v447, %v446
  %v545 = vpack.c.b16 %v449, %v448
  %v546 = vpack.c.b16 %v451, %v450
  %v547 = vpack.c.b16 %v453, %v452
  %v548 = vpack.c.b16 %v455, %v454
  %v549 = vpack.c.b16 %v457, %v456
  %v550 = vpack.c.b16 %v459, %v458
  %v551 = vpack.c.b16 %v461, %v460
  %v552 = vpack.c.b16 %v463, %v462
  %v553 = vpack.c.b16 %v465, %v464
  %v554 = vpack.c.b16 %v467, %v466
  %v555 = vpack.c.b16 %v469, %v468
  %v556 = vpack.c.b16 %v471, %v470
  %v557 = vpack.c.b16 %v473, %v472
  %v558 = vpack.c.b16 %v475, %v474
  %v559 = vpack.c.b16 %v477, %v476
  %v560 = vpack.c.b16 %v479, %v478
  %v561 = vpack.c.b16 %v481, %v480
  %v562 = vpack.c.b16 %v483, %v482
  %v563 = vpack.c.b16 %v485, %v484
  %v564 = vpack.c.b16 %v487, %v486
  %v565 = vpack.c.b16 %v489, %v488
  %v566 = vpack.c.b16 %v491, %v490
  %v567 = vpack.c.b16 %v493, %v492
  %v568 = vpack.c.b16 %v495, %v494
  %v569 = vpack.c.b16 %v497, %v496
  %v570 = vpack.c.b16 %v499, %v498
  %v571 = vpack.c.b16 %v501, %v500
  %v572 = vpack.c.b16 %v503, %v502
  %v573 = vpack.c.b16 %v505, %v504
  %v574 = vpack.c.b16 %v507, %v506
  %v575 = vpack.c.b16 %v509, %v508
  %v576 = vpack.c.b16 %v511, %v510
  %v577 = vpack.c.b16 %v513, %v512
  %642 = vmatprep.subr.bf16.mxu0 0
  %643 = vmatpush1.bf16.msra.mxu0 %v521
  %644 = vmatprep.subr.bf16.mxu0 0
  %645 = vmatpush1.bf16.msra.mxu0 %v520
  %646 = vmatprep.subr.bf16.mxu0 0
  %647 = vmatpush1.bf16.msra.mxu0 %v519
  %648 = vmatprep.subr.bf16.mxu0 0
  %649 = vmatpush1.bf16.msra.mxu0 %v518
  %650 = vmatprep.subr.bf16.mxu0 0
  %651 = vmatpush1.bf16.msra.mxu0 %v517
  %652 = vmatprep.subr.bf16.mxu0 0
  %653 = vmatpush1.bf16.msra.mxu0 %v516
  %654 = vmatprep.subr.bf16.mxu0 0
  %655 = vmatpush1.bf16.msra.mxu0 %v515
  %656 = vmatprep.subr.bf16.mxu0 0
  %657 = vmatpush1.bf16.msra.mxu0 %v514
  %658 = vmatprep.subr.bf16.mxu0 0
  %659 = vmatpush2.bf16.msra.mxu0 %v529
  %660 = vmatprep.subr.bf16.mxu0 0
  %661 = vmatpush2.bf16.msra.mxu0 %v528
  %662 = vmatprep.subr.bf16.mxu0 0
  %663 = vmatpush2.bf16.msra.mxu0 %v527
  %664 = vmatprep.subr.bf16.mxu0 0
  %665 = vmatpush2.bf16.msra.mxu0 %v526
  %666 = vmatprep.subr.bf16.mxu0 0
  %667 = vmatpush2.bf16.msra.mxu0 %v525
  %668 = vmatprep.subr.bf16.mxu0 0
  %669 = vmatpush2.bf16.msra.mxu0 %v524
  %670 = vmatprep.subr.bf16.mxu0 0
  %671 = vmatpush2.bf16.msra.mxu0 %v523
  %672 = vmatprep.subr.bf16.mxu0 0
  %673 = vmatpush2.bf16.msra.mxu0 %v522
  %674 = vmatprep.mubr.bf16.mxu0 %v112
  %675 = vmatmul.mubr.bf16.gmra.mxu0 %v111
  %v676 = vpop.f32.mrf.mxu0
  %v677 = vadd.f32 %v257, %v676
  %v678 = vpop.f32.mrf.mxu0
  %v679 = vpop.f32.mrf.mxu0
  %v680 = vpop.f32.mrf.mxu0
  %681 = vdwg.mxu0
  %682 = vmatprep.subr.bf16.mxu0 0
  %683 = vmatpush1.bf16.msra.mxu0 %v537
  %684 = vmatprep.subr.bf16.mxu0 0
  %685 = vmatpush1.bf16.msra.mxu0 %v536
  %686 = vmatprep.subr.bf16.mxu0 0
  %687 = vmatpush1.bf16.msra.mxu0 %v535
  %688 = vmatprep.subr.bf16.mxu0 0
  %689 = vmatpush1.bf16.msra.mxu0 %v534
  %690 = vmatprep.subr.bf16.mxu0 0
  %691 = vmatpush1.bf16.msra.mxu0 %v533
  %692 = vmatprep.subr.bf16.mxu0 0
  %693 = vmatpush1.bf16.msra.mxu0 %v532
  %694 = vmatprep.subr.bf16.mxu0 0
  %695 = vmatpush1.bf16.msra.mxu0 %v531
  %696 = vmatprep.subr.bf16.mxu0 0
  %697 = vmatpush1.bf16.msra.mxu0 %v530
  %698 = vmatprep.subr.bf16.mxu0 0
  %699 = vmatpush2.bf16.msra.mxu0 %v545
  %700 = vmatprep.subr.bf16.mxu0 0
  %701 = vmatpush2.bf16.msra.mxu0 %v544
  %702 = vmatprep.subr.bf16.mxu0 0
  %703 = vmatpush2.bf16.msra.mxu0 %v543
  %704 = vmatprep.subr.bf16.mxu0 0
  %705 = vmatpush2.bf16.msra.mxu0 %v542
  %706 = vmatprep.subr.bf16.mxu0 0
  %707 = vmatpush2.bf16.msra.mxu0 %v541
  %708 = vmatprep.subr.bf16.mxu0 0
  %709 = vmatpush2.bf16.msra.mxu0 %v540
  %710 = vmatprep.subr.bf16.mxu0 0
  %711 = vmatpush2.bf16.msra.mxu0 %v539
  %712 = vmatprep.subr.bf16.mxu0 0
  %713 = vmatpush2.bf16.msra.mxu0 %v538
  %714 = vmatprep.mubr.bf16.mxu0 %v114
  %715 = vmatmul.mubr.bf16.gmra.mxu0 %v113
  %v716 = vpop.f32.mrf.mxu0
  %v717 = vadd.f32 %v677, %v716
  %v718 = vpop.f32.mrf.mxu0
  %v719 = vpop.f32.mrf.mxu0
  %v720 = vpop.f32.mrf.mxu0
  %721 = vdwg.mxu0
  %722 = vmatprep.subr.bf16.mxu0 0
  %723 = vmatpush1.bf16.msra.mxu0 %v553
  %724 = vmatprep.subr.bf16.mxu0 0
  %725 = vmatpush1.bf16.msra.mxu0 %v552
  %726 = vmatprep.subr.bf16.mxu0 0
  %727 = vmatpush1.bf16.msra.mxu0 %v551
  %728 = vmatprep.subr.bf16.mxu0 0
  %729 = vmatpush1.bf16.msra.mxu0 %v550
  %730 = vmatprep.subr.bf16.mxu0 0
  %731 = vmatpush1.bf16.msra.mxu0 %v549
  %732 = vmatprep.subr.bf16.mxu0 0
  %733 = vmatpush1.bf16.msra.mxu0 %v548
  %734 = vmatprep.subr.bf16.mxu0 0
  %735 = vmatpush1.bf16.msra.mxu0 %v547
  %736 = vmatprep.subr.bf16.mxu0 0
  %737 = vmatpush1.bf16.msra.mxu0 %v546
  %738 = vmatprep.subr.bf16.mxu0 0
  %739 = vmatpush2.bf16.msra.mxu0 %v561
  %740 = vmatprep.subr.bf16.mxu0 0
  %741 = vmatpush2.bf16.msra.mxu0 %v560
  %742 = vmatprep.subr.bf16.mxu0 0
  %743 = vmatpush2.bf16.msra.mxu0 %v559
  %744 = vmatprep.subr.bf16.mxu0 0
  %745 = vmatpush2.bf16.msra.mxu0 %v558
  %746 = vmatprep.subr.bf16.mxu0 0
  %747 = vmatpush2.bf16.msra.mxu0 %v557
  %748 = vmatprep.subr.bf16.mxu0 0
  %749 = vmatpush2.bf16.msra.mxu0 %v556
  %750 = vmatprep.subr.bf16.mxu0 0
  %751 = vmatpush2.bf16.msra.mxu0 %v555
  %752 = vmatprep.subr.bf16.mxu0 0
  %753 = vmatpush2.bf16.msra.mxu0 %v554
  %754 = vmatprep.mubr.bf16.mxu0 %v116
  %755 = vmatmul.mubr.bf16.gmra.mxu0 %v115
  %v756 = vpop.f32.mrf.mxu0
  %v757 = vadd.f32 %v717, %v756
  %v758 = vpop.f32.mrf.mxu0
  %v759 = vpop.f32.mrf.mxu0
  %v760 = vpop.f32.mrf.mxu0
  %761 = vdwg.mxu0
  %762 = vmatprep.subr.bf16.mxu0 0
  %763 = vmatpush1.bf16.msra.mxu0 %v569
  %764 = vmatprep.subr.bf16.mxu0 0
  %765 = vmatpush1.bf16.msra.mxu0 %v568
  %766 = vmatprep.subr.bf16.mxu0 0
  %767 = vmatpush1.bf16.msra.mxu0 %v567
  %768 = vmatprep.subr.bf16.mxu0 0
  %769 = vmatpush1.bf16.msra.mxu0 %v566
  %770 = vmatprep.subr.bf16.mxu0 0
  %771 = vmatpush1.bf16.msra.mxu0 %v565
  %772 = vmatprep.subr.bf16.mxu0 0
  %773 = vmatpush1.bf16.msra.mxu0 %v564
  %774 = vmatprep.subr.bf16.mxu0 0
  %775 = vmatpush1.bf16.msra.mxu0 %v563
  %776 = vmatprep.subr.bf16.mxu0 0
  %777 = vmatpush1.bf16.msra.mxu0 %v562
  %778 = vmatprep.subr.bf16.mxu0 0
  %779 = vmatpush2.bf16.msra.mxu0 %v577
  %780 = vmatprep.subr.bf16.mxu0 0
  %781 = vmatpush2.bf16.msra.mxu0 %v576
  %782 = vmatprep.subr.bf16.mxu0 0
  %783 = vmatpush2.bf16.msra.mxu0 %v575
  %784 = vmatprep.subr.bf16.mxu0 0
  %785 = vmatpush2.bf16.msra.mxu0 %v574
  %786 = vmatprep.subr.bf16.mxu0 0
  %787 = vmatpush2.bf16.msra.mxu0 %v573
  %788 = vmatprep.subr.bf16.mxu0 0
  %789 = vmatpush2.bf16.msra.mxu0 %v572
  %790 = vmatprep.subr.bf16.mxu0 0
  %791 = vmatpush2.bf16.msra.mxu0 %v571
  %792 = vmatprep.subr.bf16.mxu0 0
  %793 = vmatpush2.bf16.msra.mxu0 %v570
  %794 = vmatprep.mubr.bf16.mxu0 %v118
  %795 = vmatmul.mubr.bf16.gmra.mxu0 %v117
  %v796 = vpop.f32.mrf.mxu0
  %v797 = vadd.f32 %v757, %v796
  %v798 = vpop.f32.mrf.mxu0
  %v799 = vpop.f32.mrf.mxu0
  %v800 = vpop.f32.mrf.mxu0
  %801 = vdwg.mxu0
  %v802 = vmax.f32 %v797, 0.0
  %v803 = vpack.c.bf16 %v802, %v802
  %v804 = vlaneseq
  %v805 = vshrl.u32 %v804, 7
  %v806 = vsub.s32 1, %v805
  %v807 = vrot.slane %v251, %v806
  %vm808 = vcmask 261120
  %v810 = vsel %vm808, %v803, 0
  %812 = vmatprep.subr.bf16.mxu0 0
  %813 = vmatpush1.bf16.msra.mxu0 0
  %814 = vmatprep.subr.bf16.mxu0 0
  %815 = vmatpush1.bf16.msra.mxu0 0
  %816 = vmatprep.subr.bf16.mxu0 0
  %817 = vmatpush1.bf16.msra.mxu0 0
  %818 = vmatprep.subr.bf16.mxu0 0
  %819 = vmatpush1.bf16.msra.mxu0 0
  %820 = vmatprep.subr.bf16.mxu0 0
  %821 = vmatpush1.bf16.msra.mxu0 0
  %822 = vmatprep.subr.bf16.mxu0 0
  %823 = vmatpush1.bf16.msra.mxu0 0
  %824 = vmatprep.subr.bf16.mxu0 0
  %825 = vmatpush1.bf16.msra.mxu0 %v253
  %826 = vmatprep.subr.bf16.mxu0 0
  %827 = vmatpush1.bf16.msra.mxu0 %v252
  %828 = vmatprep.subr.bf16.mxu0 0
  %829 = vmatpush2.bf16.msra.mxu0 0
  %830 = vmatprep.subr.bf16.mxu0 0
  %831 = vmatpush2.bf16.msra.mxu0 0
  %832 = vmatprep.subr.bf16.mxu0 0
  %833 = vmatpush2.bf16.msra.mxu0 0
  %834 = vmatprep.subr.bf16.mxu0 0
  %835 = vmatpush2.bf16.msra.mxu0 0
  %836 = vmatprep.subr.bf16.mxu0 0
  %837 = vmatpush2.bf16.msra.mxu0 0
  %838 = vmatprep.subr.bf16.mxu0 0
  %839 = vmatpush2.bf16.msra.mxu0 0
  %840 = vmatprep.subr.bf16.mxu0 0
  %841 = vmatpush2.bf16.msra.mxu0 0
  %842 = vmatprep.subr.bf16.mxu0 0
  %843 = vmatpush2.bf16.msra.mxu0 0
  %844 = vmatprep.mubr.bf16.mxu0 0
  %845 = vmatmul.mubr.bf16.gmra.mxu0 %v810
  %v846 = vpop.f32.mrf.mxu0
  %v847 = vadd.f32 %v807, %v846
  %v848 = vpop.f32.mrf.mxu0
  %v849 = vpop.f32.mrf.mxu0
  %v850 = vpop.f32.mrf.mxu0
  %851 = vdwg.mxu0
  %vm852 = vcmask 123904
  %853 = vst.msk [vmem:[%s4] sm:$0x3] %vm852, %v847
  // Predicated region
  $region18: #{my_siamese_2p.1} parent=0 // pred_check
    _
  $region19: #{my_siamese_2p.1} parent=0 // pred_check_branch
    %855 = sbr.rel (0) target = $region21
  $region20: #{my_siamese_2p.1} parent=0 // pred_region
    _
  $region21: #{my_siamese_2p.1} parent=0 // pred_fallthru
    _
  // Predicated region
  $region22: #{my_siamese_2p.1} parent=0 // pred_check
    _
  $region23: #{my_siamese_2p.1} parent=0 // pred_check_branch
    %857 = sbr.rel (0) target = $region25
  $region24: #{my_siamese_2p.1} parent=0 // pred_region
    _
  $region25: #{my_siamese_2p.1} parent=0 // pred_fallthru
    _

</llo_original>
